<compile_context>
chip_gen: v7x
topology: tpu7x:2x2x1
jax: 0.10.0
libtpu: 0.0.40
codegen_flags: <defaults>
</compile_context>

<pallas_src>
import jax
import jax.numpy as jnp
from jax.experimental import pallas as pl
from jax.experimental.pallas import tpu as pltpu


def _discount_kernel(cf_ref, mult_ref, out_ref):
    # (bt, T) * (1, T) broadcast multiply in f32, cast back to output dtype.
    x = cf_ref[...].astype(jnp.float32)
    out_ref[...] = (x * mult_ref[...]).astype(out_ref.dtype)


def _tpu_generation():
    """Best-effort TPU generation detection (7 -> v7x, 6 -> v6e, 5 -> v5e)."""
    try:
        kind = jax.devices()[0].device_kind.lower()
    except Exception:  # pragma: no cover - CPU/interpret fallback
        kind = ""
    if "v7" in kind:
        return 7
    if "v6" in kind:
        return 6
    if "v5" in kind:
        return 5
    return 6  # conservative default


def discount_forward(cf, forward_rate, pos=1.0, weight=None, bias=None, *, batch_tile=None):
    """cf: (B, T); forward_rate: (T,). Returns cf / cumprod(fr) / fr**(pos-1)."""
    B, T = cf.shape
    assert forward_rate.shape == (T,)

    # TODO(synk): `sens` is not defined in the provided source; assumed to be
    # rate * weight + bias, with weight=1 / bias=0 when None.
    w = jnp.float32(1.0) if weight is None else jnp.asarray(weight, jnp.float32)
    b = jnp.float32(0.0) if bias is None else jnp.asarray(bias, jnp.float32)
    pos = jnp.asarray(pos, jnp.float32)  # avoid recompiles per Python pos value under jit
    fr = 1.0 + (forward_rate.astype(jnp.float32) * w + b)              # (T,)
    divider = jnp.cumprod(fr, axis=0)                                  # exact cumprod (matches torch)
    mult = (1.0 / (divider * jnp.power(fr, pos - 1.0))).reshape(1, T)  # (1, T) f32

    # --- per-generation block budget / VMEM limit / TC count -----------------
    gen = _tpu_generation()
    itemsize = jnp.dtype(cf.dtype).itemsize
    sublane = max(8, 32 // itemsize)      # 8 rows f32, 16 bf16, 32 int8
    if gen >= 7:
        budget, vmem_limit, two_tc = 8 << 20, 48 << 20, True
    elif gen == 6:
        budget, vmem_limit, two_tc = 4 << 20, None, False
    else:  # v5e: 16 MiB scoped-VMEM default -> keep 2 MiB blocks, don't grow.
        budget, vmem_limit, two_tc = 2 << 20, None, False

    # --- batch tile ----------------------------------------------------------
    if batch_tile is None:
        rows_by_vmem = max(sublane, (budget // (T * itemsize)) // sublane * sublane)
        if rows_by_vmem >= B:
            # Whole batch fits in one block.
            if two_tc and B >= 2 * sublane:
                # Force >= 2 grid steps only where megacore sharding exists.
                batch_tile = max(sublane, pl.cdiv(pl.cdiv(B, 2), sublane) * sublane)
            else:
                batch_tile = B            # full-dim block: always a legal shape
        else:
            batch_tile = rows_by_vmem     # sublane-aligned partial-batch tile
    else:
        batch_tile = min(B, max(sublane, (batch_tile // sublane) * sublane))

    # No padding / slicing: Pallas masks writes in the trailing partial block.
    grid_b = pl.cdiv(B, batch_tile)

    out = pl.pallas_call(
        _discount_kernel,
        out_shape=jax.ShapeDtypeStruct((B, T), cf.dtype),
        grid=(grid_b,),
        in_specs=[
            pl.BlockSpec((batch_tile, T), lambda i: (i, 0)),   # cf tile (full T)
            pl.BlockSpec((1, T), lambda i: (0, 0)),            # precomputed multiplier row
        ],
        out_specs=pl.BlockSpec((batch_tile, T), lambda i: (i, 0)),
        compiler_params=pltpu.CompilerParams(
            dimension_semantics=("parallel",),
            vmem_limit_bytes=vmem_limit,
        ),
    )(cf, mult)
    return out


def discount_forward_ref(cf, forward_rate, pos=1.0, weight=None, bias=None):
    w = 1.0 if weight is None else weight
    b = 0.0 if bias is None else bias
    fr = 1.0 + (forward_rate * w + b)
    divider = jnp.cumprod(fr, axis=0)
    return cf / divider / jnp.power(fr, pos - 1.0)


if __name__ == "__main__":
    B, T = 16, 128          # batch x time_len (time_len plays the role of MAX_YR_LEN)
    pos = 1.5

    key = jax.random.PRNGKey(0)
    k_rate, k_cf = jax.random.split(key)
    # Deterministic init in the module's rate range [0.01, 0.05].
    forward_rate = jax.random.uniform(k_rate, (T,), jnp.float32, minval=0.01, maxval=0.05)
    cf = jax.random.normal(k_cf, (B, T), jnp.float32)

    out = discount_forward(cf, forward_rate, pos=pos)
    out = jax.block_until_ready(out)

    ref = discount_forward_ref(cf, forward_rate, pos=pos)
    assert out.shape == (B, T)
    assert out.dtype == cf.dtype
    assert jnp.allclose(out, ref, rtol=5e-4, atol=1e-5), "mismatch vs reference"
    print("KERNEL_OK")
</pallas_src>

<mosaic_0001>
module attributes {stable_mosaic.version = 11 : i64} {
  func.func @_discount_kernel(%arg0: i32, %arg1: memref<16x128xf32, #tpu.memory_space<vmem>>, %arg2: memref<1x128xf32, #tpu.memory_space<vmem>>, %arg3: memref<16x128xf32, #tpu.memory_space<vmem>>) attributes {dimension_semantics = [#tpu.dimension_semantics<parallel>], iteration_bounds = array<i64: 1>, scalar_prefetch = 0 : i64, scratch_operands = 0 : i64, tpu.core_type = #tpu.core_type<tc>, window_params = [{transform_indices = @transform_0, window_bounds = array<i64: 16, 128>}, {pipeline_mode = #tpu.pipeline_mode<synchronous>, transform_indices = @transform_1, window_bounds = array<i64: 1, 128>}, {transform_indices = @transform_2, window_bounds = array<i64: 16, 128>}]} {
    %c0 = arith.constant 0 : index
    %c0_0 = arith.constant 0 : index
    %0 = vector.load %arg1[%c0, %c0_0] : memref<16x128xf32, #tpu.memory_space<vmem>>, vector<16x128xf32>
    %c0_1 = arith.constant 0 : index
    %c0_2 = arith.constant 0 : index
    %1 = vector.load %arg2[%c0_1, %c0_2] : memref<1x128xf32, #tpu.memory_space<vmem>>, vector<1x128xf32>
    %2 = vector.broadcast %1 : vector<1x128xf32> to vector<16x128xf32>
    %3 = arith.mulf %0, %2 : vector<16x128xf32>
    %c0_3 = arith.constant 0 : index
    %c0_4 = arith.constant 0 : index
    %4 = vector.load %arg3[%c0_3, %c0_4] : memref<16x128xf32, #tpu.memory_space<vmem>>, vector<16x128xf32>
    tpu.vector_store %arg3[%c0_3, %c0_4], %3 {strides = array<i32>} : memref<16x128xf32, #tpu.memory_space<vmem>>, vector<16x128xf32>,
    return
  }
  func.func @transform_0(%arg0: i32) -> (i32, i32) {
    %c0_i32 = arith.constant 0 : i32
    %c0_i32_0 = arith.constant 0 : i32
    return %arg0, %c0_i32 : i32, i32
  }
  func.func @transform_1(%arg0: i32) -> (i32, i32) {
    %c0_i32 = arith.constant 0 : i32
    %c0_i32_0 = arith.constant 0 : i32
    %c0_i32_1 = arith.constant 0 : i32
    return %c0_i32, %c0_i32_0 : i32, i32
  }
  func.func @transform_2(%arg0: i32) -> (i32, i32) {
    %c0_i32 = arith.constant 0 : i32
    %c0_i32_0 = arith.constant 0 : i32
    return %arg0, %c0_i32 : i32, i32
  }
}

</mosaic_0001>

<llo_original>
// kernel: tpu_custom_call.1
$region0: #{tpu_custom_call.1}
  #allocation0 [shape = 'u32[]', space=smem, size = 0x4, offset = 0x4, fixed_abs, tag = 'smem constant byte address 0x4 - core index']
  #allocation1 [shape = 'u32[144,128]{1,0:T(1,128)}', space=vmem, size = 0x12000, scoped, tag = 'internal scratch']
  %s0 = inlined_call_operand.hbm [shape: f32[16,128], index: 0, kind: input, shape index: {}]
  %s1 = inlined_call_operand.vmem [shape: f32[1,128], index: 1, kind: input, shape index: {}]
  %s2 = inlined_call_operand.hbm [shape: f32[16,128], index: 2, kind: output, shape index: {}]
  %s3 = sld [smem:[#allocation0]]
  $region22: #{tpu_custom_call.1} parent=0
    _
  %s5 = ssub.s32 1, %s3
  %s6 = scalar_select 0, %s5, %s3
  $region1: #{tpu_custom_call.1} parent=0
    #allocation2 [shape = 'u8[8192]{0}', space=vmem, size = 0x2000, scoped, tag = 'input window, operand 0, single buffered']
    #allocation3 [shape = 's32[1]{0}', space=sflag, size = 0x4, scoped, tag = 'scoped memory for tpu_custom_call.1']
    #allocation4 [shape = 's32[1]{0}', space=sflag, size = 0x4, scoped, tag = 'scoped memory for tpu_custom_call.1']
    #allocation5 [shape = 'u8[8192]{0}', space=vmem, size = 0x2000, scoped, tag = 'output window, operand 0, single buffered']
    %7 = vsyncpa [#allocation3], 0
    %8 = vsyncpa [#allocation4], 0
    // Predicated region
    $region2: #{tpu_custom_call.1} parent=1 // pred_check
      _
    $region3: #{tpu_custom_call.1} parent=1 // pred_check_branch
      %10 = sbr.rel (0) target = $region5
    $region4: #{tpu_custom_call.1} parent=1 // pred_region
      %s12 = ssub.s32 256, 256
      %13 = vsyncadd [#allocation3], %s12
      %s14 = sshll.u32 [#allocation2], 4
      %s15 = int_to_ptr.vmem [resolvable:$true] %s14
      %20 = dma.hbm_to_vmem [thread:$0]  %s0, 256, %s15, [#allocation3], 128, 128, 8
    $region5: #{tpu_custom_call.1} parent=1 // pred_fallthru
      _
    // Predicated region
    $region6: #{tpu_custom_call.1} parent=1 // pred_check
      _
    $region7: #{tpu_custom_call.1} parent=1 // pred_check_branch
      %22 = sbr.rel (0) target = $region9
    $region8: #{tpu_custom_call.1} parent=1 // pred_region
      _
    $region9: #{tpu_custom_call.1} parent=1 // pred_fallthru
      _
    // Predicated region
    $region10: #{tpu_custom_call.1} parent=1 // pred_check
      _
    $region11: #{tpu_custom_call.1} parent=1 // pred_check_branch
      %24 = sbr.rel (0) target = $region13
    $region12: #{tpu_custom_call.1} parent=1 // pred_region
      %25 = dma.done [#allocation3], 256
    $region13: #{tpu_custom_call.1} parent=1 // pred_fallthru
      _
    %v26 = vld [vmem:[#allocation2] sm:$0xff]
    %v27 = vld [vmem:[#allocation2 + $0x8] sm:$0xff]
    %v28 = vld [vmem:[%s1] sm:$0x1]
    %v30 = vlaneseq
    %v31 = vshrl.u32 %v30, 7
    %v32 = vsub.s32 0, %v31
    %v33 = vrot.slane %v28, %v32
    %v35 = vmul.f32 %v26, %v33
    %v36 = vmul.f32 %v27, %v33
    %37 = vst [vmem:[#allocation5] sm:$0xff] %v35
    %38 = vst [vmem:[#allocation5 + $0x8] sm:$0xff] %v36
    // Predicated region
    $region14: #{tpu_custom_call.1} parent=1 // pred_check
      _
    $region15: #{tpu_custom_call.1} parent=1 // pred_check_branch
      %40 = sbr.rel (0) target = $region17
    $region16: #{tpu_custom_call.1} parent=1 // pred_region
      %s42 = ssub.s32 256, 256
      %43 = vsyncadd [#allocation4], %s42
      %s44 = sshll.u32 [#allocation5], 4
      %s45 = int_to_ptr.vmem [resolvable:$true] %s44
      %50 = dma.vmem_to_hbm [thread:$0]  %s45, 256, %s2, [#allocation4], 128, 128, 8
    $region17: #{tpu_custom_call.1} parent=1 // pred_fallthru
      _
    // Predicated region
    $region18: #{tpu_custom_call.1} parent=1 // pred_check
      _
    $region19: #{tpu_custom_call.1} parent=1 // pred_check_branch
      %52 = sbr.rel (0) target = $region21
    $region20: #{tpu_custom_call.1} parent=1 // pred_region
      %53 = dma.done [#allocation4], 256
    $region21: #{tpu_custom_call.1} parent=1 // pred_fallthru
      _
    %54 = vsyncpa [#allocation3], 1
    %55 = vsyncpa [#allocation4], 1

</llo_original>
